<compile_context>
chip_gen: v7x
topology: tpu7x:2x2x1
jax: 0.10.0
libtpu: 0.0.40
codegen_flags: <defaults>
</compile_context>

<pallas_src>
import jax
import jax.numpy as jnp
from jax.experimental import pallas as pl
from jax.experimental.pallas import tpu as pltpu

LANES = 128
D_IN, H1, H2, D_OUT = 2, 10, 5, 1


def _round_up(a, m):
    return ((a + m - 1) // m) * m


def ffn_kernel(w1_ref, b1_ref, w2_ref, b2_ref, w3_ref, b3_ref, x_ref, o_ref):
    """x_ref: (2, tile_s, 128) f32 VMEM block (batch is sublane x lane dense).
    w*/b* refs: small f32 arrays resident in SMEM for the whole grid.
    o_ref: (tile_s, 128) f32 output block (lane-dense store).
    """
    x0 = x_ref[0]  # (tile_s, 128)
    x1 = x_ref[1]  # (tile_s, 128)

    # Layer 1 (2->10) + ReLU, fused with the layer-2 (10->5) accumulation.
    # Each h1 row is consumed immediately so only x0/x1, one h1 temp and the
    # 5 layer-2 accumulators are live (low spill pressure at big tiles).
    h2_acc = None
    for k in range(H1):
        h1_k = jnp.maximum(
            x0 * w1_ref[0, k] + x1 * w1_ref[1, k] + b1_ref[k], 0.0)
        if h2_acc is None:
            h2_acc = [h1_k * w2_ref[k, j] for j in range(H2)]
        else:
            h2_acc = [h2_acc[j] + h1_k * w2_ref[k, j] for j in range(H2)]

    # Layer 2 bias + ReLU, then layer 3 (5->1) as unrolled FMAs.
    y = None
    for j in range(H2):
        h2_j = jnp.maximum(h2_acc[j] + b2_ref[j], 0.0)
        term = h2_j * w3_ref[j, 0]
        y = term if y is None else y + term

    o_ref[...] = (y + b3_ref[0]).astype(o_ref.dtype)


def ffn_forward(x, params, *, max_tile_s=512):
    """x: (B, 2) float32. Returns (B, 1) float32 (same semantics as the
    PyTorch module). max_tile_s = sublane-rows per tile (multiple of 8);
    tile batch size = max_tile_s * 128 rows."""
    assert max_tile_s % 8 == 0
    B = x.shape[0]

    # Lane-dense batch tiling: pad B up to a whole number of (tile_s, 128)
    # tiles, present x batch-last as (2, S, 128).
    s_needed = -(-B // LANES)                      # cdiv(B, 128)
    tile_s = min(max_tile_s, _round_up(s_needed, 8))
    S = _round_up(s_needed, tile_s)
    B_pad = S * LANES

    xt = jnp.pad(x.T, ((0, 0), (0, B_pad - B)))    # (2, B_pad)
    xt = xt.reshape(D_IN, S, LANES)

    w1, b1 = params["w1"], params["b1"]
    w2, b2 = params["w2"], params["b2"]
    w3, b3 = params["w3"], params["b3"]

    # Weights/biases: whole-array SMEM residents (no per-step DMA re-issue).
    smem = pl.BlockSpec(memory_space=pltpu.MemorySpace.SMEM)

    out = pl.pallas_call(
        ffn_kernel,
        out_shape=jax.ShapeDtypeStruct((S, LANES), jnp.float32),
        grid=(S // tile_s,),
        in_specs=[smem, smem, smem, smem, smem, smem,
                  pl.BlockSpec((D_IN, tile_s, LANES), lambda i: (0, i, 0))],
        out_specs=pl.BlockSpec((tile_s, LANES), lambda i: (i, 0)),
        compiler_params=pltpu.CompilerParams(
            dimension_semantics=("parallel",)),   # shards batch across TCs on v7x
    )(w1, b1, w2, b2, w3, b3, xt)

    return out.reshape(B_pad)[:B].reshape(B, 1)


def init_params(key):
    """Deterministic init matching PyTorch nn.Linear shapes.

    PyTorch stores weight as (out, in); we keep (in, out) so the math is
    x @ W + b. Uses uniform(-1/sqrt(fan_in), 1/sqrt(fan_in)) like torch.
    """
    def linear(key, fan_in, fan_out):
        kw, kb = jax.random.split(key)
        bound = 1.0 / jnp.sqrt(fan_in)
        w = jax.random.uniform(kw, (fan_in, fan_out), jnp.float32, -bound, bound)
        b = jax.random.uniform(kb, (fan_out,), jnp.float32, -bound, bound)
        return w, b

    k1, k2, k3 = jax.random.split(key, 3)
    w1, b1 = linear(k1, D_IN, H1)
    w2, b2 = linear(k2, H1, H2)
    w3, b3 = linear(k3, H2, D_OUT)
    return {"w1": w1, "b1": b1, "w2": w2, "b2": b2, "w3": w3, "b3": b3}


def ffn_reference(x, params):
    h1 = jnp.maximum(x @ params["w1"] + params["b1"], 0.0)
    h2 = jnp.maximum(h1 @ params["w2"] + params["b2"], 0.0)
    return h2 @ params["w3"] + params["b3"]


if __name__ == "__main__":
    key = jax.random.PRNGKey(0)
    k_param, k_x1, k_x2 = jax.random.split(key, 3)
    params = init_params(k_param)

    # Small case consistent with the tutorial's toy regression (batch=8, 2 feats).
    B = 8
    x = jax.random.normal(k_x1, (B, 2), jnp.float32)
    out = jax.block_until_ready(ffn_forward(x, params))
    ref = ffn_reference(x, params)
    assert out.shape == (B, 1), out.shape
    assert jnp.allclose(out, ref, atol=1e-5, rtol=1e-4), (out, ref)

    # Multi-tile case: small tiles to exercise the pipelined batch grid + tail padding.
    B2 = 2048
    x2 = jax.random.normal(k_x2, (B2, 2), jnp.float32)
    out2 = jax.block_until_ready(ffn_forward(x2, params, max_tile_s=8))
    ref2 = ffn_reference(x2, params)
    assert out2.shape == (B2, 1), out2.shape
    assert jnp.allclose(out2, ref2, atol=1e-5, rtol=1e-4)

    print("KERNEL_OK")
</pallas_src>

<mosaic_0001>
module attributes {stable_mosaic.version = 11 : i64} {
  func.func @ffn_kernel(%arg0: i32, %arg1: memref<2x10xf32, #tpu.memory_space<smem>>, %arg2: memref<10xf32, #tpu.memory_space<smem>>, %arg3: memref<10x5xf32, #tpu.memory_space<smem>>, %arg4: memref<5xf32, #tpu.memory_space<smem>>, %arg5: memref<5x1xf32, #tpu.memory_space<smem>>, %arg6: memref<1xf32, #tpu.memory_space<smem>>, %arg7: memref<2x8x128xf32, #tpu.memory_space<vmem>>, %arg8: memref<8x128xf32, #tpu.memory_space<vmem>>) attributes {dimension_semantics = [#tpu.dimension_semantics<parallel>], iteration_bounds = array<i64: 1>, scalar_prefetch = 0 : i64, scratch_operands = 0 : i64, tpu.core_type = #tpu.core_type<tc>, window_params = [{transform_indices = @transform_0, window_bounds = array<i64: 2, 10>}, {transform_indices = @transform_1, window_bounds = array<i64: 10>}, {transform_indices = @transform_2, window_bounds = array<i64: 10, 5>}, {transform_indices = @transform_3, window_bounds = array<i64: 5>}, {transform_indices = @transform_4, window_bounds = array<i64: 5, 1>}, {transform_indices = @transform_5, window_bounds = array<i64: 1>}, {transform_indices = @transform_6, window_bounds = array<i64: 2, 8, 128>}, {transform_indices = @transform_7, window_bounds = array<i64: 8, 128>}]} {
    %c0 = arith.constant 0 : index
    %c0_0 = arith.constant 0 : index
    %c0_1 = arith.constant 0 : index
    %0 = vector.load %arg7[%c0, %c0_0, %c0_1] : memref<2x8x128xf32, #tpu.memory_space<vmem>>, vector<1x8x128xf32>
    %1 = vector.shape_cast %0 : vector<1x8x128xf32> to vector<8x128xf32>
    %c1 = arith.constant 1 : index
    %c0_2 = arith.constant 0 : index
    %c0_3 = arith.constant 0 : index
    %2 = vector.load %arg7[%c1, %c0_2, %c0_3] : memref<2x8x128xf32, #tpu.memory_space<vmem>>, vector<1x8x128xf32>
    %3 = vector.shape_cast %2 : vector<1x8x128xf32> to vector<8x128xf32>
    %c0_4 = arith.constant 0 : index
    %c0_5 = arith.constant 0 : index
    %4 = memref.load %arg1[%c0_4, %c0_5] : memref<2x10xf32, #tpu.memory_space<smem>>
    %5 = vector.broadcast %4 : f32 to vector<8x128xf32>
    %6 = arith.mulf %1, %5 : vector<8x128xf32>
    %c1_6 = arith.constant 1 : index
    %c0_7 = arith.constant 0 : index
    %7 = memref.load %arg1[%c1_6, %c0_7] : memref<2x10xf32, #tpu.memory_space<smem>>
    %8 = vector.broadcast %7 : f32 to vector<8x128xf32>
    %9 = arith.mulf %3, %8 : vector<8x128xf32>
    %10 = arith.addf %6, %9 : vector<8x128xf32>
    %c0_8 = arith.constant 0 : index
    %11 = memref.load %arg2[%c0_8] : memref<10xf32, #tpu.memory_space<smem>>
    %12 = vector.broadcast %11 : f32 to vector<8x128xf32>
    %13 = arith.addf %10, %12 : vector<8x128xf32>
    %cst = arith.constant 0.000000e+00 : f32
    %14 = vector.broadcast %cst : f32 to vector<8x128xf32>
    %15 = arith.maximumf %13, %14 : vector<8x128xf32>
    %c0_9 = arith.constant 0 : index
    %c0_10 = arith.constant 0 : index
    %16 = memref.load %arg3[%c0_9, %c0_10] : memref<10x5xf32, #tpu.memory_space<smem>>
    %17 = vector.broadcast %16 : f32 to vector<8x128xf32>
    %18 = arith.mulf %15, %17 : vector<8x128xf32>
    %c0_11 = arith.constant 0 : index
    %c1_12 = arith.constant 1 : index
    %19 = memref.load %arg3[%c0_11, %c1_12] : memref<10x5xf32, #tpu.memory_space<smem>>
    %20 = vector.broadcast %19 : f32 to vector<8x128xf32>
    %21 = arith.mulf %15, %20 : vector<8x128xf32>
    %c0_13 = arith.constant 0 : index
    %c2 = arith.constant 2 : index
    %22 = memref.load %arg3[%c0_13, %c2] : memref<10x5xf32, #tpu.memory_space<smem>>
    %23 = vector.broadcast %22 : f32 to vector<8x128xf32>
    %24 = arith.mulf %15, %23 : vector<8x128xf32>
    %c0_14 = arith.constant 0 : index
    %c3 = arith.constant 3 : index
    %25 = memref.load %arg3[%c0_14, %c3] : memref<10x5xf32, #tpu.memory_space<smem>>
    %26 = vector.broadcast %25 : f32 to vector<8x128xf32>
    %27 = arith.mulf %15, %26 : vector<8x128xf32>
    %c0_15 = arith.constant 0 : index
    %c4 = arith.constant 4 : index
    %28 = memref.load %arg3[%c0_15, %c4] : memref<10x5xf32, #tpu.memory_space<smem>>
    %29 = vector.broadcast %28 : f32 to vector<8x128xf32>
    %30 = arith.mulf %15, %29 : vector<8x128xf32>
    %c0_16 = arith.constant 0 : index
    %c1_17 = arith.constant 1 : index
    %31 = memref.load %arg1[%c0_16, %c1_17] : memref<2x10xf32, #tpu.memory_space<smem>>
    %32 = vector.broadcast %31 : f32 to vector<8x128xf32>
    %33 = arith.mulf %1, %32 : vector<8x128xf32>
    %c1_18 = arith.constant 1 : index
    %c1_19 = arith.constant 1 : index
    %34 = memref.load %arg1[%c1_18, %c1_19] : memref<2x10xf32, #tpu.memory_space<smem>>
    %35 = vector.broadcast %34 : f32 to vector<8x128xf32>
    %36 = arith.mulf %3, %35 : vector<8x128xf32>
    %37 = arith.addf %33, %36 : vector<8x128xf32>
    %c1_20 = arith.constant 1 : index
    %38 = memref.load %arg2[%c1_20] : memref<10xf32, #tpu.memory_space<smem>>
    %39 = vector.broadcast %38 : f32 to vector<8x128xf32>
    %40 = arith.addf %37, %39 : vector<8x128xf32>
    %cst_21 = arith.constant 0.000000e+00 : f32
    %41 = vector.broadcast %cst_21 : f32 to vector<8x128xf32>
    %42 = arith.maximumf %40, %41 : vector<8x128xf32>
    %c1_22 = arith.constant 1 : index
    %c0_23 = arith.constant 0 : index
    %43 = memref.load %arg3[%c1_22, %c0_23] : memref<10x5xf32, #tpu.memory_space<smem>>
    %44 = vector.broadcast %43 : f32 to vector<8x128xf32>
    %45 = arith.mulf %42, %44 : vector<8x128xf32>
    %46 = arith.addf %18, %45 : vector<8x128xf32>
    %c1_24 = arith.constant 1 : index
    %c1_25 = arith.constant 1 : index
    %47 = memref.load %arg3[%c1_24, %c1_25] : memref<10x5xf32, #tpu.memory_space<smem>>
    %48 = vector.broadcast %47 : f32 to vector<8x128xf32>
    %49 = arith.mulf %42, %48 : vector<8x128xf32>
    %50 = arith.addf %21, %49 : vector<8x128xf32>
    %c1_26 = arith.constant 1 : index
    %c2_27 = arith.constant 2 : index
    %51 = memref.load %arg3[%c1_26, %c2_27] : memref<10x5xf32, #tpu.memory_space<smem>>
    %52 = vector.broadcast %51 : f32 to vector<8x128xf32>
    %53 = arith.mulf %42, %52 : vector<8x128xf32>
    %54 = arith.addf %24, %53 : vector<8x128xf32>
    %c1_28 = arith.constant 1 : index
    %c3_29 = arith.constant 3 : index
    %55 = memref.load %arg3[%c1_28, %c3_29] : memref<10x5xf32, #tpu.memory_space<smem>>
    %56 = vector.broadcast %55 : f32 to vector<8x128xf32>
    %57 = arith.mulf %42, %56 : vector<8x128xf32>
    %58 = arith.addf %27, %57 : vector<8x128xf32>
    %c1_30 = arith.constant 1 : index
    %c4_31 = arith.constant 4 : index
    %59 = memref.load %arg3[%c1_30, %c4_31] : memref<10x5xf32, #tpu.memory_space<smem>>
    %60 = vector.broadcast %59 : f32 to vector<8x128xf32>
    %61 = arith.mulf %42, %60 : vector<8x128xf32>
    %62 = arith.addf %30, %61 : vector<8x128xf32>
    %c0_32 = arith.constant 0 : index
    %c2_33 = arith.constant 2 : index
    %63 = memref.load %arg1[%c0_32, %c2_33] : memref<2x10xf32, #tpu.memory_space<smem>>
    %64 = vector.broadcast %63 : f32 to vector<8x128xf32>
    %65 = arith.mulf %1, %64 : vector<8x128xf32>
    %c1_34 = arith.constant 1 : index
    %c2_35 = arith.constant 2 : index
    %66 = memref.load %arg1[%c1_34, %c2_35] : memref<2x10xf32, #tpu.memory_space<smem>>
    %67 = vector.broadcast %66 : f32 to vector<8x128xf32>
    %68 = arith.mulf %3, %67 : vector<8x128xf32>
    %69 = arith.addf %65, %68 : vector<8x128xf32>
    %c2_36 = arith.constant 2 : index
    %70 = memref.load %arg2[%c2_36] : memref<10xf32, #tpu.memory_space<smem>>
    %71 = vector.broadcast %70 : f32 to vector<8x128xf32>
    %72 = arith.addf %69, %71 : vector<8x128xf32>
    %cst_37 = arith.constant 0.000000e+00 : f32
    %73 = vector.broadcast %cst_37 : f32 to vector<8x128xf32>
    %74 = arith.maximumf %72, %73 : vector<8x128xf32>
    %c2_38 = arith.constant 2 : index
    %c0_39 = arith.constant 0 : index
    %75 = memref.load %arg3[%c2_38, %c0_39] : memref<10x5xf32, #tpu.memory_space<smem>>
    %76 = vector.broadcast %75 : f32 to vector<8x128xf32>
    %77 = arith.mulf %74, %76 : vector<8x128xf32>
    %78 = arith.addf %46, %77 : vector<8x128xf32>
    %c2_40 = arith.constant 2 : index
    %c1_41 = arith.constant 1 : index
    %79 = memref.load %arg3[%c2_40, %c1_41] : memref<10x5xf32, #tpu.memory_space<smem>>
    %80 = vector.broadcast %79 : f32 to vector<8x128xf32>
    %81 = arith.mulf %74, %80 : vector<8x128xf32>
    %82 = arith.addf %50, %81 : vector<8x128xf32>
    %c2_42 = arith.constant 2 : index
    %c2_43 = arith.constant 2 : index
    %83 = memref.load %arg3[%c2_42, %c2_43] : memref<10x5xf32, #tpu.memory_space<smem>>
    %84 = vector.broadcast %83 : f32 to vector<8x128xf32>
    %85 = arith.mulf %74, %84 : vector<8x128xf32>
    %86 = arith.addf %54, %85 : vector<8x128xf32>
    %c2_44 = arith.constant 2 : index
    %c3_45 = arith.constant 3 : index
    %87 = memref.load %arg3[%c2_44, %c3_45] : memref<10x5xf32, #tpu.memory_space<smem>>
    %88 = vector.broadcast %87 : f32 to vector<8x128xf32>
    %89 = arith.mulf %74, %88 : vector<8x128xf32>
    %90 = arith.addf %58, %89 : vector<8x128xf32>
    %c2_46 = arith.constant 2 : index
    %c4_47 = arith.constant 4 : index
    %91 = memref.load %arg3[%c2_46, %c4_47] : memref<10x5xf32, #tpu.memory_space<smem>>
    %92 = vector.broadcast %91 : f32 to vector<8x128xf32>
    %93 = arith.mulf %74, %92 : vector<8x128xf32>
    %94 = arith.addf %62, %93 : vector<8x128xf32>
    %c0_48 = arith.constant 0 : index
    %c3_49 = arith.constant 3 : index
    %95 = memref.load %arg1[%c0_48, %c3_49] : memref<2x10xf32, #tpu.memory_space<smem>>
    %96 = vector.broadcast %95 : f32 to vector<8x128xf32>
    %97 = arith.mulf %1, %96 : vector<8x128xf32>
    %c1_50 = arith.constant 1 : index
    %c3_51 = arith.constant 3 : index
    %98 = memref.load %arg1[%c1_50, %c3_51] : memref<2x10xf32, #tpu.memory_space<smem>>
    %99 = vector.broadcast %98 : f32 to vector<8x128xf32>
    %100 = arith.mulf %3, %99 : vector<8x128xf32>
    %101 = arith.addf %97, %100 : vector<8x128xf32>
    %c3_52 = arith.constant 3 : index
    %102 = memref.load %arg2[%c3_52] : memref<10xf32, #tpu.memory_space<smem>>
    %103 = vector.broadcast %102 : f32 to vector<8x128xf32>
    %104 = arith.addf %101, %103 : vector<8x128xf32>
    %cst_53 = arith.constant 0.000000e+00 : f32
    %105 = vector.broadcast %cst_53 : f32 to vector<8x128xf32>
    %106 = arith.maximumf %104, %105 : vector<8x128xf32>
    %c3_54 = arith.constant 3 : index
    %c0_55 = arith.constant 0 : index
    %107 = memref.load %arg3[%c3_54, %c0_55] : memref<10x5xf32, #tpu.memory_space<smem>>
    %108 = vector.broadcast %107 : f32 to vector<8x128xf32>
    %109 = arith.mulf %106, %108 : vector<8x128xf32>
    %110 = arith.addf %78, %109 : vector<8x128xf32>
    %c3_56 = arith.constant 3 : index
    %c1_57 = arith.constant 1 : index
    %111 = memref.load %arg3[%c3_56, %c1_57] : memref<10x5xf32, #tpu.memory_space<smem>>
    %112 = vector.broadcast %111 : f32 to vector<8x128xf32>
    %113 = arith.mulf %106, %112 : vector<8x128xf32>
    %114 = arith.addf %82, %113 : vector<8x128xf32>
    %c3_58 = arith.constant 3 : index
    %c2_59 = arith.constant 2 : index
    %115 = memref.load %arg3[%c3_58, %c2_59] : memref<10x5xf32, #tpu.memory_space<smem>>
    %116 = vector.broadcast %115 : f32 to vector<8x128xf32>
    %117 = arith.mulf %106, %116 : vector<8x128xf32>
    %118 = arith.addf %86, %117 : vector<8x128xf32>
    %c3_60 = arith.constant 3 : index
    %c3_61 = arith.constant 3 : index
    %119 = memref.load %arg3[%c3_60, %c3_61] : memref<10x5xf32, #tpu.memory_space<smem>>
    %120 = vector.broadcast %119 : f32 to vector<8x128xf32>
    %121 = arith.mulf %106, %120 : vector<8x128xf32>
    %122 = arith.addf %90, %121 : vector<8x128xf32>
    %c3_62 = arith.constant 3 : index
    %c4_63 = arith.constant 4 : index
    %123 = memref.load %arg3[%c3_62, %c4_63] : memref<10x5xf32, #tpu.memory_space<smem>>
    %124 = vector.broadcast %123 : f32 to vector<8x128xf32>
    %125 = arith.mulf %106, %124 : vector<8x128xf32>
    %126 = arith.addf %94, %125 : vector<8x128xf32>
    %c0_64 = arith.constant 0 : index
    %c4_65 = arith.constant 4 : index
    %127 = memref.load %arg1[%c0_64, %c4_65] : memref<2x10xf32, #tpu.memory_space<smem>>
    %128 = vector.broadcast %127 : f32 to vector<8x128xf32>
    %129 = arith.mulf %1, %128 : vector<8x128xf32>
    %c1_66 = arith.constant 1 : index
    %c4_67 = arith.constant 4 : index
    %130 = memref.load %arg1[%c1_66, %c4_67] : memref<2x10xf32, #tpu.memory_space<smem>>
    %131 = vector.broadcast %130 : f32 to vector<8x128xf32>
    %132 = arith.mulf %3, %131 : vector<8x128xf32>
    %133 = arith.addf %129, %132 : vector<8x128xf32>
    %c4_68 = arith.constant 4 : index
    %134 = memref.load %arg2[%c4_68] : memref<10xf32, #tpu.memory_space<smem>>
    %135 = vector.broadcast %134 : f32 to vector<8x128xf32>
    %136 = arith.addf %133, %135 : vector<8x128xf32>
    %cst_69 = arith.constant 0.000000e+00 : f32
    %137 = vector.broadcast %cst_69 : f32 to vector<8x128xf32>
    %138 = arith.maximumf %136, %137 : vector<8x128xf32>
    %c4_70 = arith.constant 4 : index
    %c0_71 = arith.constant 0 : index
    %139 = memref.load %arg3[%c4_70, %c0_71] : memref<10x5xf32, #tpu.memory_space<smem>>
    %140 = vector.broadcast %139 : f32 to vector<8x128xf32>
    %141 = arith.mulf %138, %140 : vector<8x128xf32>
    %142 = arith.addf %110, %141 : vector<8x128xf32>
    %c4_72 = arith.constant 4 : index
    %c1_73 = arith.constant 1 : index
    %143 = memref.load %arg3[%c4_72, %c1_73] : memref<10x5xf32, #tpu.memory_space<smem>>
    %144 = vector.broadcast %143 : f32 to vector<8x128xf32>
    %145 = arith.mulf %138, %144 : vector<8x128xf32>
    %146 = arith.addf %114, %145 : vector<8x128xf32>
    %c4_74 = arith.constant 4 : index
    %c2_75 = arith.constant 2 : index
    %147 = memref.load %arg3[%c4_74, %c2_75] : memref<10x5xf32, #tpu.memory_space<smem>>
    %148 = vector.broadcast %147 : f32 to vector<8x128xf32>
    %149 = arith.mulf %138, %148 : vector<8x128xf32>
    %150 = arith.addf %118, %149 : vector<8x128xf32>
    %c4_76 = arith.constant 4 : index
    %c3_77 = arith.constant 3 : index
    %151 = memref.load %arg3[%c4_76, %c3_77] : memref<10x5xf32, #tpu.memory_space<smem>>
    %152 = vector.broadcast %151 : f32 to vector<8x128xf32>
    %153 = arith.mulf %138, %152 : vector<8x128xf32>
    %154 = arith.addf %122, %153 : vector<8x128xf32>
    %c4_78 = arith.constant 4 : index
    %c4_79 = arith.constant 4 : index
    %155 = memref.load %arg3[%c4_78, %c4_79] : memref<10x5xf32, #tpu.memory_space<smem>>
    %156 = vector.broadcast %155 : f32 to vector<8x128xf32>
    %157 = arith.mulf %138, %156 : vector<8x128xf32>
    %158 = arith.addf %126, %157 : vector<8x128xf32>
    %c0_80 = arith.constant 0 : index
    %c5 = arith.constant 5 : index
    %159 = memref.load %arg1[%c0_80, %c5] : memref<2x10xf32, #tpu.memory_space<smem>>
    %160 = vector.broadcast %159 : f32 to vector<8x128xf32>
    %161 = arith.mulf %1, %160 : vector<8x128xf32>
    %c1_81 = arith.constant 1 : index
    %c5_82 = arith.constant 5 : index
    %162 = memref.load %arg1[%c1_81, %c5_82] : memref<2x10xf32, #tpu.memory_space<smem>>
    %163 = vector.broadcast %162 : f32 to vector<8x128xf32>
    %164 = arith.mulf %3, %163 : vector<8x128xf32>
    %165 = arith.addf %161, %164 : vector<8x128xf32>
    %c5_83 = arith.constant 5 : index
    %166 = memref.load %arg2[%c5_83] : memref<10xf32, #tpu.memory_space<smem>>
    %167 = vector.broadcast %166 : f32 to vector<8x128xf32>
    %168 = arith.addf %165, %167 : vector<8x128xf32>
    %cst_84 = arith.constant 0.000000e+00 : f32
    %169 = vector.broadcast %cst_84 : f32 to vector<8x128xf32>
    %170 = arith.maximumf %168, %169 : vector<8x128xf32>
    %c5_85 = arith.constant 5 : index
    %c0_86 = arith.constant 0 : index
    %171 = memref.load %arg3[%c5_85, %c0_86] : memref<10x5xf32, #tpu.memory_space<smem>>
    %172 = vector.broadcast %171 : f32 to vector<8x128xf32>
    %173 = arith.mulf %170, %172 : vector<8x128xf32>
    %174 = arith.addf %142, %173 : vector<8x128xf32>
    %c5_87 = arith.constant 5 : index
    %c1_88 = arith.constant 1 : index
    %175 = memref.load %arg3[%c5_87, %c1_88] : memref<10x5xf32, #tpu.memory_space<smem>>
    %176 = vector.broadcast %175 : f32 to vector<8x128xf32>
    %177 = arith.mulf %170, %176 : vector<8x128xf32>
    %178 = arith.addf %146, %177 : vector<8x128xf32>
    %c5_89 = arith.constant 5 : index
    %c2_90 = arith.constant 2 : index
    %179 = memref.load %arg3[%c5_89, %c2_90] : memref<10x5xf32, #tpu.memory_space<smem>>
    %180 = vector.broadcast %179 : f32 to vector<8x128xf32>
    %181 = arith.mulf %170, %180 : vector<8x128xf32>
    %182 = arith.addf %150, %181 : vector<8x128xf32>
    %c5_91 = arith.constant 5 : index
    %c3_92 = arith.constant 3 : index
    %183 = memref.load %arg3[%c5_91, %c3_92] : memref<10x5xf32, #tpu.memory_space<smem>>
    %184 = vector.broadcast %183 : f32 to vector<8x128xf32>
    %185 = arith.mulf %170, %184 : vector<8x128xf32>
    %186 = arith.addf %154, %185 : vector<8x128xf32>
    %c5_93 = arith.constant 5 : index
    %c4_94 = arith.constant 4 : index
    %187 = memref.load %arg3[%c5_93, %c4_94] : memref<10x5xf32, #tpu.memory_space<smem>>
    %188 = vector.broadcast %187 : f32 to vector<8x128xf32>
    %189 = arith.mulf %170, %188 : vector<8x128xf32>
    %190 = arith.addf %158, %189 : vector<8x128xf32>
    %c0_95 = arith.constant 0 : index
    %c6 = arith.constant 6 : index
    %191 = memref.load %arg1[%c0_95, %c6] : memref<2x10xf32, #tpu.memory_space<smem>>
    %192 = vector.broadcast %191 : f32 to vector<8x128xf32>
    %193 = arith.mulf %1, %192 : vector<8x128xf32>
    %c1_96 = arith.constant 1 : index
    %c6_97 = arith.constant 6 : index
    %194 = memref.load %arg1[%c1_96, %c6_97] : memref<2x10xf32, #tpu.memory_space<smem>>
    %195 = vector.broadcast %194 : f32 to vector<8x128xf32>
    %196 = arith.mulf %3, %195 : vector<8x128xf32>
    %197 = arith.addf %193, %196 : vector<8x128xf32>
    %c6_98 = arith.constant 6 : index
    %198 = memref.load %arg2[%c6_98] : memref<10xf32, #tpu.memory_space<smem>>
    %199 = vector.broadcast %198 : f32 to vector<8x128xf32>
    %200 = arith.addf %197, %199 : vector<8x128xf32>
    %cst_99 = arith.constant 0.000000e+00 : f32
    %201 = vector.broadcast %cst_99 : f32 to vector<8x128xf32>
    %202 = arith.maximumf %200, %201 : vector<8x128xf32>
    %c6_100 = arith.constant 6 : index
    %c0_101 = arith.constant 0 : index
    %203 = memref.load %arg3[%c6_100, %c0_101] : memref<10x5xf32, #tpu.memory_space<smem>>
    %204 = vector.broadcast %203 : f32 to vector<8x128xf32>
    %205 = arith.mulf %202, %204 : vector<8x128xf32>
    %206 = arith.addf %174, %205 : vector<8x128xf32>
    %c6_102 = arith.constant 6 : index
    %c1_103 = arith.constant 1 : index
    %207 = memref.load %arg3[%c6_102, %c1_103] : memref<10x5xf32, #tpu.memory_space<smem>>
    %208 = vector.broadcast %207 : f32 to vector<8x128xf32>
    %209 = arith.mulf %202, %208 : vector<8x128xf32>
    %210 = arith.addf %178, %209 : vector<8x128xf32>
    %c6_104 = arith.constant 6 : index
    %c2_105 = arith.constant 2 : index
    %211 = memref.load %arg3[%c6_104, %c2_105] : memref<10x5xf32, #tpu.memory_space<smem>>
    %212 = vector.broadcast %211 : f32 to vector<8x128xf32>
    %213 = arith.mulf %202, %212 : vector<8x128xf32>
    %214 = arith.addf %182, %213 : vector<8x128xf32>
    %c6_106 = arith.constant 6 : index
    %c3_107 = arith.constant 3 : index
    %215 = memref.load %arg3[%c6_106, %c3_107] : memref<10x5xf32, #tpu.memory_space<smem>>
    %216 = vector.broadcast %215 : f32 to vector<8x128xf32>
    %217 = arith.mulf %202, %216 : vector<8x128xf32>
    %218 = arith.addf %186, %217 : vector<8x128xf32>
    %c6_108 = arith.constant 6 : index
    %c4_109 = arith.constant 4 : index
    %219 = memref.load %arg3[%c6_108, %c4_109] : memref<10x5xf32, #tpu.memory_space<smem>>
    %220 = vector.broadcast %219 : f32 to vector<8x128xf32>
    %221 = arith.mulf %202, %220 : vector<8x128xf32>
    %222 = arith.addf %190, %221 : vector<8x128xf32>
    %c0_110 = arith.constant 0 : index
    %c7 = arith.constant 7 : index
    %223 = memref.load %arg1[%c0_110, %c7] : memref<2x10xf32, #tpu.memory_space<smem>>
    %224 = vector.broadcast %223 : f32 to vector<8x128xf32>
    %225 = arith.mulf %1, %224 : vector<8x128xf32>
    %c1_111 = arith.constant 1 : index
    %c7_112 = arith.constant 7 : index
    %226 = memref.load %arg1[%c1_111, %c7_112] : memref<2x10xf32, #tpu.memory_space<smem>>
    %227 = vector.broadcast %226 : f32 to vector<8x128xf32>
    %228 = arith.mulf %3, %227 : vector<8x128xf32>
    %229 = arith.addf %225, %228 : vector<8x128xf32>
    %c7_113 = arith.constant 7 : index
    %230 = memref.load %arg2[%c7_113] : memref<10xf32, #tpu.memory_space<smem>>
    %231 = vector.broadcast %230 : f32 to vector<8x128xf32>
    %232 = arith.addf %229, %231 : vector<8x128xf32>
    %cst_114 = arith.constant 0.000000e+00 : f32
    %233 = vector.broadcast %cst_114 : f32 to vector<8x128xf32>
    %234 = arith.maximumf %232, %233 : vector<8x128xf32>
    %c7_115 = arith.constant 7 : index
    %c0_116 = arith.constant 0 : index
    %235 = memref.load %arg3[%c7_115, %c0_116] : memref<10x5xf32, #tpu.memory_space<smem>>
    %236 = vector.broadcast %235 : f32 to vector<8x128xf32>
    %237 = arith.mulf %234, %236 : vector<8x128xf32>
    %238 = arith.addf %206, %237 : vector<8x128xf32>
    %c7_117 = arith.constant 7 : index
    %c1_118 = arith.constant 1 : index
    %239 = memref.load %arg3[%c7_117, %c1_118] : memref<10x5xf32, #tpu.memory_space<smem>>
    %240 = vector.broadcast %239 : f32 to vector<8x128xf32>
    %241 = arith.mulf %234, %240 : vector<8x128xf32>
    %242 = arith.addf %210, %241 : vector<8x128xf32>
    %c7_119 = arith.constant 7 : index
    %c2_120 = arith.constant 2 : index
    %243 = memref.load %arg3[%c7_119, %c2_120] : memref<10x5xf32, #tpu.memory_space<smem>>
    %244 = vector.broadcast %243 : f32 to vector<8x128xf32>
    %245 = arith.mulf %234, %244 : vector<8x128xf32>
    %246 = arith.addf %214, %245 : vector<8x128xf32>
    %c7_121 = arith.constant 7 : index
    %c3_122 = arith.constant 3 : index
    %247 = memref.load %arg3[%c7_121, %c3_122] : memref<10x5xf32, #tpu.memory_space<smem>>
    %248 = vector.broadcast %247 : f32 to vector<8x128xf32>
    %249 = arith.mulf %234, %248 : vector<8x128xf32>
    %250 = arith.addf %218, %249 : vector<8x128xf32>
    %c7_123 = arith.constant 7 : index
    %c4_124 = arith.constant 4 : index
    %251 = memref.load %arg3[%c7_123, %c4_124] : memref<10x5xf32, #tpu.memory_space<smem>>
    %252 = vector.broadcast %251 : f32 to vector<8x128xf32>
    %253 = arith.mulf %234, %252 : vector<8x128xf32>
    %254 = arith.addf %222, %253 : vector<8x128xf32>
    %c0_125 = arith.constant 0 : index
    %c8 = arith.constant 8 : index
    %255 = memref.load %arg1[%c0_125, %c8] : memref<2x10xf32, #tpu.memory_space<smem>>
    %256 = vector.broadcast %255 : f32 to vector<8x128xf32>
    %257 = arith.mulf %1, %256 : vector<8x128xf32>
    %c1_126 = arith.constant 1 : index
    %c8_127 = arith.constant 8 : index
    %258 = memref.load %arg1[%c1_126, %c8_127] : memref<2x10xf32, #tpu.memory_space<smem>>
    %259 = vector.broadcast %258 : f32 to vector<8x128xf32>
    %260 = arith.mulf %3, %259 : vector<8x128xf32>
    %261 = arith.addf %257, %260 : vector<8x128xf32>
    %c8_128 = arith.constant 8 : index
    %262 = memref.load %arg2[%c8_128] : memref<10xf32, #tpu.memory_space<smem>>
    %263 = vector.broadcast %262 : f32 to vector<8x128xf32>
    %264 = arith.addf %261, %263 : vector<8x128xf32>
    %cst_129 = arith.constant 0.000000e+00 : f32
    %265 = vector.broadcast %cst_129 : f32 to vector<8x128xf32>
    %266 = arith.maximumf %264, %265 : vector<8x128xf32>
    %c8_130 = arith.constant 8 : index
    %c0_131 = arith.constant 0 : index
    %267 = memref.load %arg3[%c8_130, %c0_131] : memref<10x5xf32, #tpu.memory_space<smem>>
    %268 = vector.broadcast %267 : f32 to vector<8x128xf32>
    %269 = arith.mulf %266, %268 : vector<8x128xf32>
    %270 = arith.addf %238, %269 : vector<8x128xf32>
    %c8_132 = arith.constant 8 : index
    %c1_133 = arith.constant 1 : index
    %271 = memref.load %arg3[%c8_132, %c1_133] : memref<10x5xf32, #tpu.memory_space<smem>>
    %272 = vector.broadcast %271 : f32 to vector<8x128xf32>
    %273 = arith.mulf %266, %272 : vector<8x128xf32>
    %274 = arith.addf %242, %273 : vector<8x128xf32>
    %c8_134 = arith.constant 8 : index
    %c2_135 = arith.constant 2 : index
    %275 = memref.load %arg3[%c8_134, %c2_135] : memref<10x5xf32, #tpu.memory_space<smem>>
    %276 = vector.broadcast %275 : f32 to vector<8x128xf32>
    %277 = arith.mulf %266, %276 : vector<8x128xf32>
    %278 = arith.addf %246, %277 : vector<8x128xf32>
    %c8_136 = arith.constant 8 : index
    %c3_137 = arith.constant 3 : index
    %279 = memref.load %arg3[%c8_136, %c3_137] : memref<10x5xf32, #tpu.memory_space<smem>>
    %280 = vector.broadcast %279 : f32 to vector<8x128xf32>
    %281 = arith.mulf %266, %280 : vector<8x128xf32>
    %282 = arith.addf %250, %281 : vector<8x128xf32>
    %c8_138 = arith.constant 8 : index
    %c4_139 = arith.constant 4 : index
    %283 = memref.load %arg3[%c8_138, %c4_139] : memref<10x5xf32, #tpu.memory_space<smem>>
    %284 = vector.broadcast %283 : f32 to vector<8x128xf32>
    %285 = arith.mulf %266, %284 : vector<8x128xf32>
    %286 = arith.addf %254, %285 : vector<8x128xf32>
    %c0_140 = arith.constant 0 : index
    %c9 = arith.constant 9 : index
    %287 = memref.load %arg1[%c0_140, %c9] : memref<2x10xf32, #tpu.memory_space<smem>>
    %288 = vector.broadcast %287 : f32 to vector<8x128xf32>
    %289 = arith.mulf %1, %288 : vector<8x128xf32>
    %c1_141 = arith.constant 1 : index
    %c9_142 = arith.constant 9 : index
    %290 = memref.load %arg1[%c1_141, %c9_142] : memref<2x10xf32, #tpu.memory_space<smem>>
    %291 = vector.broadcast %290 : f32 to vector<8x128xf32>
    %292 = arith.mulf %3, %291 : vector<8x128xf32>
    %293 = arith.addf %289, %292 : vector<8x128xf32>
    %c9_143 = arith.constant 9 : index
    %294 = memref.load %arg2[%c9_143] : memref<10xf32, #tpu.memory_space<smem>>
    %295 = vector.broadcast %294 : f32 to vector<8x128xf32>
    %296 = arith.addf %293, %295 : vector<8x128xf32>
    %cst_144 = arith.constant 0.000000e+00 : f32
    %297 = vector.broadcast %cst_144 : f32 to vector<8x128xf32>
    %298 = arith.maximumf %296, %297 : vector<8x128xf32>
    %c9_145 = arith.constant 9 : index
    %c0_146 = arith.constant 0 : index
    %299 = memref.load %arg3[%c9_145, %c0_146] : memref<10x5xf32, #tpu.memory_space<smem>>
    %300 = vector.broadcast %299 : f32 to vector<8x128xf32>
    %301 = arith.mulf %298, %300 : vector<8x128xf32>
    %302 = arith.addf %270, %301 : vector<8x128xf32>
    %c9_147 = arith.constant 9 : index
    %c1_148 = arith.constant 1 : index
    %303 = memref.load %arg3[%c9_147, %c1_148] : memref<10x5xf32, #tpu.memory_space<smem>>
    %304 = vector.broadcast %303 : f32 to vector<8x128xf32>
    %305 = arith.mulf %298, %304 : vector<8x128xf32>
    %306 = arith.addf %274, %305 : vector<8x128xf32>
    %c9_149 = arith.constant 9 : index
    %c2_150 = arith.constant 2 : index
    %307 = memref.load %arg3[%c9_149, %c2_150] : memref<10x5xf32, #tpu.memory_space<smem>>
    %308 = vector.broadcast %307 : f32 to vector<8x128xf32>
    %309 = arith.mulf %298, %308 : vector<8x128xf32>
    %310 = arith.addf %278, %309 : vector<8x128xf32>
    %c9_151 = arith.constant 9 : index
    %c3_152 = arith.constant 3 : index
    %311 = memref.load %arg3[%c9_151, %c3_152] : memref<10x5xf32, #tpu.memory_space<smem>>
    %312 = vector.broadcast %311 : f32 to vector<8x128xf32>
    %313 = arith.mulf %298, %312 : vector<8x128xf32>
    %314 = arith.addf %282, %313 : vector<8x128xf32>
    %c9_153 = arith.constant 9 : index
    %c4_154 = arith.constant 4 : index
    %315 = memref.load %arg3[%c9_153, %c4_154] : memref<10x5xf32, #tpu.memory_space<smem>>
    %316 = vector.broadcast %315 : f32 to vector<8x128xf32>
    %317 = arith.mulf %298, %316 : vector<8x128xf32>
    %318 = arith.addf %286, %317 : vector<8x128xf32>
    %c0_155 = arith.constant 0 : index
    %319 = memref.load %arg4[%c0_155] : memref<5xf32, #tpu.memory_space<smem>>
    %320 = vector.broadcast %319 : f32 to vector<8x128xf32>
    %321 = arith.addf %302, %320 : vector<8x128xf32>
    %cst_156 = arith.constant 0.000000e+00 : f32
    %322 = vector.broadcast %cst_156 : f32 to vector<8x128xf32>
    %323 = arith.maximumf %321, %322 : vector<8x128xf32>
    %c0_157 = arith.constant 0 : index
    %c0_158 = arith.constant 0 : index
    %324 = memref.load %arg5[%c0_157, %c0_158] : memref<5x1xf32, #tpu.memory_space<smem>>
    %325 = vector.broadcast %324 : f32 to vector<8x128xf32>
    %326 = arith.mulf %323, %325 : vector<8x128xf32>
    %c1_159 = arith.constant 1 : index
    %327 = memref.load %arg4[%c1_159] : memref<5xf32, #tpu.memory_space<smem>>
    %328 = vector.broadcast %327 : f32 to vector<8x128xf32>
    %329 = arith.addf %306, %328 : vector<8x128xf32>
    %cst_160 = arith.constant 0.000000e+00 : f32
    %330 = vector.broadcast %cst_160 : f32 to vector<8x128xf32>
    %331 = arith.maximumf %329, %330 : vector<8x128xf32>
    %c1_161 = arith.constant 1 : index
    %c0_162 = arith.constant 0 : index
    %332 = memref.load %arg5[%c1_161, %c0_162] : memref<5x1xf32, #tpu.memory_space<smem>>
    %333 = vector.broadcast %332 : f32 to vector<8x128xf32>
    %334 = arith.mulf %331, %333 : vector<8x128xf32>
    %335 = arith.addf %326, %334 : vector<8x128xf32>
    %c2_163 = arith.constant 2 : index
    %336 = memref.load %arg4[%c2_163] : memref<5xf32, #tpu.memory_space<smem>>
    %337 = vector.broadcast %336 : f32 to vector<8x128xf32>
    %338 = arith.addf %310, %337 : vector<8x128xf32>
    %cst_164 = arith.constant 0.000000e+00 : f32
    %339 = vector.broadcast %cst_164 : f32 to vector<8x128xf32>
    %340 = arith.maximumf %338, %339 : vector<8x128xf32>
    %c2_165 = arith.constant 2 : index
    %c0_166 = arith.constant 0 : index
    %341 = memref.load %arg5[%c2_165, %c0_166] : memref<5x1xf32, #tpu.memory_space<smem>>
    %342 = vector.broadcast %341 : f32 to vector<8x128xf32>
    %343 = arith.mulf %340, %342 : vector<8x128xf32>
    %344 = arith.addf %335, %343 : vector<8x128xf32>
    %c3_167 = arith.constant 3 : index
    %345 = memref.load %arg4[%c3_167] : memref<5xf32, #tpu.memory_space<smem>>
    %346 = vector.broadcast %345 : f32 to vector<8x128xf32>
    %347 = arith.addf %314, %346 : vector<8x128xf32>
    %cst_168 = arith.constant 0.000000e+00 : f32
    %348 = vector.broadcast %cst_168 : f32 to vector<8x128xf32>
    %349 = arith.maximumf %347, %348 : vector<8x128xf32>
    %c3_169 = arith.constant 3 : index
    %c0_170 = arith.constant 0 : index
    %350 = memref.load %arg5[%c3_169, %c0_170] : memref<5x1xf32, #tpu.memory_space<smem>>
    %351 = vector.broadcast %350 : f32 to vector<8x128xf32>
    %352 = arith.mulf %349, %351 : vector<8x128xf32>
    %353 = arith.addf %344, %352 : vector<8x128xf32>
    %c4_171 = arith.constant 4 : index
    %354 = memref.load %arg4[%c4_171] : memref<5xf32, #tpu.memory_space<smem>>
    %355 = vector.broadcast %354 : f32 to vector<8x128xf32>
    %356 = arith.addf %318, %355 : vector<8x128xf32>
    %cst_172 = arith.constant 0.000000e+00 : f32
    %357 = vector.broadcast %cst_172 : f32 to vector<8x128xf32>
    %358 = arith.maximumf %356, %357 : vector<8x128xf32>
    %c4_173 = arith.constant 4 : index
    %c0_174 = arith.constant 0 : index
    %359 = memref.load %arg5[%c4_173, %c0_174] : memref<5x1xf32, #tpu.memory_space<smem>>
    %360 = vector.broadcast %359 : f32 to vector<8x128xf32>
    %361 = arith.mulf %358, %360 : vector<8x128xf32>
    %362 = arith.addf %353, %361 : vector<8x128xf32>
    %c0_175 = arith.constant 0 : index
    %363 = memref.load %arg6[%c0_175] : memref<1xf32, #tpu.memory_space<smem>>
    %364 = vector.broadcast %363 : f32 to vector<8x128xf32>
    %365 = arith.addf %362, %364 : vector<8x128xf32>
    %c0_176 = arith.constant 0 : index
    %c0_177 = arith.constant 0 : index
    %366 = vector.load %arg8[%c0_176, %c0_177] : memref<8x128xf32, #tpu.memory_space<vmem>>, vector<8x128xf32>
    tpu.vector_store %arg8[%c0_176, %c0_177], %365 {strides = array<i32>} : memref<8x128xf32, #tpu.memory_space<vmem>>, vector<8x128xf32>,
    return
  }
  func.func @transform_0(%arg0: i32) -> (i32, i32) {
    %c0_i32 = arith.constant 0 : i32
    %c0_i32_0 = arith.constant 0 : i32
    %c0_i32_1 = arith.constant 0 : i32
    return %c0_i32, %c0_i32_0 : i32, i32
  }
  func.func @transform_1(%arg0: i32) -> i32 {
    %c0_i32 = arith.constant 0 : i32
    %c0_i32_0 = arith.constant 0 : i32
    return %c0_i32 : i32
  }
  func.func @transform_2(%arg0: i32) -> (i32, i32) {
    %c0_i32 = arith.constant 0 : i32
    %c0_i32_0 = arith.constant 0 : i32
    %c0_i32_1 = arith.constant 0 : i32
    return %c0_i32, %c0_i32_0 : i32, i32
  }
  func.func @transform_3(%arg0: i32) -> i32 {
    %c0_i32 = arith.constant 0 : i32
    %c0_i32_0 = arith.constant 0 : i32
    return %c0_i32 : i32
  }
  func.func @transform_4(%arg0: i32) -> (i32, i32) {
    %c0_i32 = arith.constant 0 : i32
    %c0_i32_0 = arith.constant 0 : i32
    %c0_i32_1 = arith.constant 0 : i32
    return %c0_i32, %c0_i32_0 : i32, i32
  }
  func.func @transform_5(%arg0: i32) -> i32 {
    %c0_i32 = arith.constant 0 : i32
    %c0_i32_0 = arith.constant 0 : i32
    return %c0_i32 : i32
  }
  func.func @transform_6(%arg0: i32) -> (i32, i32, i32) {
    %c0_i32 = arith.constant 0 : i32
    %c0_i32_0 = arith.constant 0 : i32
    %c0_i32_1 = arith.constant 0 : i32
    return %c0_i32, %arg0, %c0_i32_0 : i32, i32, i32
  }
  func.func @transform_7(%arg0: i32) -> (i32, i32) {
    %c0_i32 = arith.constant 0 : i32
    %c0_i32_0 = arith.constant 0 : i32
    return %arg0, %c0_i32 : i32, i32
  }
}

</mosaic_0001>

<llo_original>
// kernel: tpu_custom_call.1
$region0: #{tpu_custom_call.1}
  #allocation0 [shape = 'u32[]', space=smem, size = 0x4, offset = 0x4, fixed_abs, tag = 'smem constant byte address 0x4 - core index']
  #allocation1 [shape = 'u32[144,128]{1,0:T(1,128)}', space=vmem, size = 0x12000, scoped, tag = 'internal scratch']
  #allocation2 [shape = 'f32[1]{0:T(128)S(6)}', space=smem, size = 0x200, scoped, tag = 'scoped memory for tpu_custom_call.1']
  %s0 = inlined_call_operand.vmem [shape: f32[2,10], index: 0, kind: input, shape index: {}]
  %s1 = inlined_call_operand.vmem [shape: f32[10], index: 1, kind: input, shape index: {}]
  %s2 = inlined_call_operand.vmem [shape: f32[10,5], index: 2, kind: input, shape index: {}]
  %s3 = inlined_call_operand.vmem [shape: f32[5], index: 3, kind: input, shape index: {}]
  %s4 = inlined_call_operand.vmem [shape: f32[5,1], index: 4, kind: input, shape index: {}]
  %s5 = inlined_call_operand.<no memory space> [shape: f32[1], index: 5, kind: input, shape index: {}]
  %s6 = inlined_call_operand.vmem [shape: f32[2,8,128], index: 6, kind: input, shape index: {}]
  %s7 = inlined_call_operand.hbm [shape: f32[8,128], index: 7, kind: output, shape index: {}]
  %s8 = sld [smem:[#allocation0]]
  $region58: #{tpu_custom_call.1} parent=0
    _
  %s10 = ssub.s32 1, %s8
  %s11 = scalar_select 0, %s10, %s8
  %12 = sst [smem:[#allocation2]] %s5
  $region1: #{tpu_custom_call.1} parent=0
    #allocation3 [shape = 'u8[1024]{0}', space=smem, size = 0x400, scoped, tag = 'input window, operand 0, single buffered']
    #allocation4 [shape = 's32[1]{0}', space=sflag, size = 0x4, scoped, tag = 'scoped memory for tpu_custom_call.1']
    #allocation5 [shape = 's32[1]{0}', space=sflag, size = 0x4, scoped, tag = 'scoped memory for tpu_custom_call.1']
    #allocation6 [shape = 'u8[512]{0}', space=smem, size = 0x200, scoped, tag = 'input window, operand 1, single buffered']
    #allocation7 [shape = 's32[1]{0}', space=sflag, size = 0x4, scoped, tag = 'scoped memory for tpu_custom_call.1']
    #allocation8 [shape = 'u8[8192]{0}', space=smem, size = 0x2000, scoped, tag = 'input window, operand 2, single buffered']
    #allocation9 [shape = 'u8[512]{0}', space=smem, size = 0x200, scoped, tag = 'input window, operand 3, single buffered']
    #allocation10 [shape = 's32[1]{0}', space=sflag, size = 0x4, scoped, tag = 'scoped memory for tpu_custom_call.1']
    #allocation11 [shape = 'u8[4096]{0}', space=smem, size = 0x1000, scoped, tag = 'input window, operand 4, single buffered']
    #allocation12 [shape = 'u8[4096]{0}', space=vmem, size = 0x1000, scoped, tag = 'output window, operand 0, single buffered']
    %13 = vsyncpa [#allocation5], 0
    %14 = vsyncpa [#allocation7], 0
    %15 = vsyncpa [#allocation10], 0
    %16 = vsyncpa [#allocation4], 0
    // Predicated region
    $region2: #{tpu_custom_call.1} parent=1 // pred_check
      _
    $region3: #{tpu_custom_call.1} parent=1 // pred_check_branch
      %18 = sbr.rel (0) target = $region5
    $region4: #{tpu_custom_call.1} parent=1 // pred_region
      %s20 = ssub.s32 32, 32
      %21 = vsyncadd [#allocation5], %s20
      %s23 = sshll.u32 %s0, 4
      %s24 = int_to_ptr.vmem [resolvable:$true] %s23
      %26 = dma.vmem_to_smem %s24, 32, [#allocation3], [#allocation5]
    $region5: #{tpu_custom_call.1} parent=1 // pred_fallthru
      _
    // Predicated region
    $region6: #{tpu_custom_call.1} parent=1 // pred_check
      _
    $region7: #{tpu_custom_call.1} parent=1 // pred_check_branch
      %28 = sbr.rel (0) target = $region9
    $region8: #{tpu_custom_call.1} parent=1 // pred_region
      %s30 = ssub.s32 16, 16
      %31 = vsyncadd [#allocation7], %s30
      %s33 = sshll.u32 %s1, 4
      %s34 = int_to_ptr.vmem [resolvable:$true] %s33
      %36 = dma.vmem_to_smem %s34, 16, [#allocation6], [#allocation7]
    $region9: #{tpu_custom_call.1} parent=1 // pred_fallthru
      _
    // Predicated region
    $region10: #{tpu_custom_call.1} parent=1 // pred_check
      _
    $region11: #{tpu_custom_call.1} parent=1 // pred_check_branch
      %38 = sbr.rel (0) target = $region13
    $region12: #{tpu_custom_call.1} parent=1 // pred_region
      %s40 = ssub.s32 256, 256
      %41 = vsyncadd [#allocation7], %s40
      %s42 = sshll.u32 %s2, 4
      %s43 = int_to_ptr.vmem [resolvable:$true] %s42
      %48 = dma.vmem_to_smem %s43, 256, [#allocation8], [#allocation7], 128, 128, 8
    $region13: #{tpu_custom_call.1} parent=1 // pred_fallthru
      _
    // Predicated region
    $region14: #{tpu_custom_call.1} parent=1 // pred_check
      _
    $region15: #{tpu_custom_call.1} parent=1 // pred_check_branch
      %50 = sbr.rel (0) target = $region17
    $region16: #{tpu_custom_call.1} parent=1 // pred_region
      %s52 = ssub.s32 16, 16
      %53 = vsyncadd [#allocation10], %s52
      %s55 = sshll.u32 %s3, 4
      %s56 = int_to_ptr.vmem [resolvable:$true] %s55
      %58 = dma.vmem_to_smem %s56, 16, [#allocation9], [#allocation10]
    $region17: #{tpu_custom_call.1} parent=1 // pred_fallthru
      _
    // Predicated region
    $region18: #{tpu_custom_call.1} parent=1 // pred_check
      _
    $region19: #{tpu_custom_call.1} parent=1 // pred_check_branch
      %60 = sbr.rel (0) target = $region21
    $region20: #{tpu_custom_call.1} parent=1 // pred_region
      %s62 = ssub.s32 128, 128
      %63 = vsyncadd [#allocation10], %s62
      %s65 = sshll.u32 %s4, 4
      %s66 = int_to_ptr.vmem [resolvable:$true] %s65
      %68 = dma.vmem_to_smem %s66, 128, [#allocation11], [#allocation10]
    $region21: #{tpu_custom_call.1} parent=1 // pred_fallthru
      _
    // Predicated region
    $region22: #{tpu_custom_call.1} parent=1 // pred_check
      _
    $region23: #{tpu_custom_call.1} parent=1 // pred_check_branch
      %70 = sbr.rel (0) target = $region25
    $region24: #{tpu_custom_call.1} parent=1 // pred_region
      _
    $region25: #{tpu_custom_call.1} parent=1 // pred_fallthru
      _
    // Predicated region
    $region26: #{tpu_custom_call.1} parent=1 // pred_check
      _
    $region27: #{tpu_custom_call.1} parent=1 // pred_check_branch
      %72 = sbr.rel (0) target = $region29
    $region28: #{tpu_custom_call.1} parent=1 // pred_region
      _
    $region29: #{tpu_custom_call.1} parent=1 // pred_fallthru
      _
    // Predicated region
    $region30: #{tpu_custom_call.1} parent=1 // pred_check
      _
    $region31: #{tpu_custom_call.1} parent=1 // pred_check_branch
      %74 = sbr.rel (0) target = $region33
    $region32: #{tpu_custom_call.1} parent=1 // pred_region
      %75 = dma.done [#allocation5], 32
    $region33: #{tpu_custom_call.1} parent=1 // pred_fallthru
      _
    // Predicated region
    $region34: #{tpu_custom_call.1} parent=1 // pred_check
      _
    $region35: #{tpu_custom_call.1} parent=1 // pred_check_branch
      %77 = sbr.rel (0) target = $region37
    $region36: #{tpu_custom_call.1} parent=1 // pred_region
      %78 = dma.done [#allocation7], 16
    $region37: #{tpu_custom_call.1} parent=1 // pred_fallthru
      _
    // Predicated region
    $region38: #{tpu_custom_call.1} parent=1 // pred_check
      _
    $region39: #{tpu_custom_call.1} parent=1 // pred_check_branch
      %80 = sbr.rel (0) target = $region41
    $region40: #{tpu_custom_call.1} parent=1 // pred_region
      %81 = dma.done [#allocation7], 256
    $region41: #{tpu_custom_call.1} parent=1 // pred_fallthru
      _
    // Predicated region
    $region42: #{tpu_custom_call.1} parent=1 // pred_check
      _
    $region43: #{tpu_custom_call.1} parent=1 // pred_check_branch
      %83 = sbr.rel (0) target = $region45
    $region44: #{tpu_custom_call.1} parent=1 // pred_region
      %84 = dma.done [#allocation10], 16
    $region45: #{tpu_custom_call.1} parent=1 // pred_fallthru
      _
    // Predicated region
    $region46: #{tpu_custom_call.1} parent=1 // pred_check
      _
    $region47: #{tpu_custom_call.1} parent=1 // pred_check_branch
      %86 = sbr.rel (0) target = $region49
    $region48: #{tpu_custom_call.1} parent=1 // pred_region
      %87 = dma.done [#allocation10], 128
    $region49: #{tpu_custom_call.1} parent=1 // pred_fallthru
      _
    %88 = sfence
    %v89 = vld [vmem:[%s6] sm:$0xff]
    %s90 = scalar_lea.vmem %s6, 8
    %v91 = vld [vmem:[%s90] sm:$0xff]
    %s92 = sld [smem:[#allocation3]]
    %v93 = vstv %s92
    %v94 = vmul.f32 %v89, %v93
    %s95 = sld [smem:[#allocation3 + $0x80]]
    %v96 = vstv %s95
    %v97 = vmul.f32 %v91, %v96
    %v98 = vadd.f32 %v94, %v97
    %s99 = sld [smem:[#allocation6]]
    %v100 = vstv %s99
    %v101 = vadd.f32 %v98, %v100
    %v102 = vmax.f32 %v101, 0.0
    %s103 = sld [smem:[#allocation8]]
    %v104 = vstv %s103
    %v105 = vmul.f32 %v102, %v104
    %s106 = sld [smem:[#allocation8 + $0x1]]
    %v107 = vstv %s106
    %v108 = vmul.f32 %v102, %v107
    %s109 = sld [smem:[#allocation8 + $0x2]]
    %v110 = vstv %s109
    %v111 = vmul.f32 %v102, %v110
    %s112 = sld [smem:[#allocation8 + $0x3]]
    %v113 = vstv %s112
    %v114 = vmul.f32 %v102, %v113
    %s115 = sld [smem:[#allocation8 + $0x4]]
    %v116 = vstv %s115
    %v117 = vmul.f32 %v102, %v116
    %s118 = sld [smem:[#allocation3 + $0x1]]
    %v119 = vstv %s118
    %v120 = vmul.f32 %v89, %v119
    %s121 = sld [smem:[#allocation3 + $0x81]]
    %v122 = vstv %s121
    %v123 = vmul.f32 %v91, %v122
    %v124 = vadd.f32 %v120, %v123
    %s125 = sld [smem:[#allocation6 + $0x1]]
    %v126 = vstv %s125
    %v127 = vadd.f32 %v124, %v126
    %v128 = vmax.f32 %v127, 0.0
    %s129 = sld [smem:[#allocation8 + $0x80]]
    %v130 = vstv %s129
    %v131 = vmul.f32 %v128, %v130
    %v132 = vadd.f32 %v105, %v131
    %s133 = sld [smem:[#allocation8 + $0x81]]
    %v134 = vstv %s133
    %v135 = vmul.f32 %v128, %v134
    %v136 = vadd.f32 %v108, %v135
    %s137 = sld [smem:[#allocation8 + $0x82]]
    %v138 = vstv %s137
    %v139 = vmul.f32 %v128, %v138
    %v140 = vadd.f32 %v111, %v139
    %s141 = sld [smem:[#allocation8 + $0x83]]
    %v142 = vstv %s141
    %v143 = vmul.f32 %v128, %v142
    %v144 = vadd.f32 %v114, %v143
    %s145 = sld [smem:[#allocation8 + $0x84]]
    %v146 = vstv %s145
    %v147 = vmul.f32 %v128, %v146
    %v148 = vadd.f32 %v117, %v147
    %s149 = sld [smem:[#allocation3 + $0x2]]
    %v150 = vstv %s149
    %v151 = vmul.f32 %v89, %v150
    %s152 = sld [smem:[#allocation3 + $0x82]]
    %v153 = vstv %s152
    %v154 = vmul.f32 %v91, %v153
    %v155 = vadd.f32 %v151, %v154
    %s156 = sld [smem:[#allocation6 + $0x2]]
    %v157 = vstv %s156
    %v158 = vadd.f32 %v155, %v157
    %v159 = vmax.f32 %v158, 0.0
    %s160 = sld [smem:[#allocation8 + $0x100]]
    %v161 = vstv %s160
    %v162 = vmul.f32 %v159, %v161
    %v163 = vadd.f32 %v132, %v162
    %s164 = sld [smem:[#allocation8 + $0x101]]
    %v165 = vstv %s164
    %v166 = vmul.f32 %v159, %v165
    %v167 = vadd.f32 %v136, %v166
    %s168 = sld [smem:[#allocation8 + $0x102]]
    %v169 = vstv %s168
    %v170 = vmul.f32 %v159, %v169
    %v171 = vadd.f32 %v140, %v170
    %s172 = sld [smem:[#allocation8 + $0x103]]
    %v173 = vstv %s172
    %v174 = vmul.f32 %v159, %v173
    %v175 = vadd.f32 %v144, %v174
    %s176 = sld [smem:[#allocation8 + $0x104]]
    %v177 = vstv %s176
    %v178 = vmul.f32 %v159, %v177
    %v179 = vadd.f32 %v148, %v178
    %s180 = sld [smem:[#allocation3 + $0x3]]
    %v181 = vstv %s180
    %v182 = vmul.f32 %v89, %v181
    %s183 = sld [smem:[#allocation3 + $0x83]]
    %v184 = vstv %s183
    %v185 = vmul.f32 %v91, %v184
    %v186 = vadd.f32 %v182, %v185
    %s187 = sld [smem:[#allocation6 + $0x3]]
    %v188 = vstv %s187
    %v189 = vadd.f32 %v186, %v188
    %v190 = vmax.f32 %v189, 0.0
    %s191 = sld [smem:[#allocation8 + $0x180]]
    %v192 = vstv %s191
    %v193 = vmul.f32 %v190, %v192
    %v194 = vadd.f32 %v163, %v193
    %s195 = sld [smem:[#allocation8 + $0x181]]
    %v196 = vstv %s195
    %v197 = vmul.f32 %v190, %v196
    %v198 = vadd.f32 %v167, %v197
    %s199 = sld [smem:[#allocation8 + $0x182]]
    %v200 = vstv %s199
    %v201 = vmul.f32 %v190, %v200
    %v202 = vadd.f32 %v171, %v201
    %s203 = sld [smem:[#allocation8 + $0x183]]
    %v204 = vstv %s203
    %v205 = vmul.f32 %v190, %v204
    %v206 = vadd.f32 %v175, %v205
    %s207 = sld [smem:[#allocation8 + $0x184]]
    %v208 = vstv %s207
    %v209 = vmul.f32 %v190, %v208
    %v210 = vadd.f32 %v179, %v209
    %s211 = sld [smem:[#allocation3 + $0x4]]
    %v212 = vstv %s211
    %v213 = vmul.f32 %v89, %v212
    %s214 = sld [smem:[#allocation3 + $0x84]]
    %v215 = vstv %s214
    %v216 = vmul.f32 %v91, %v215
    %v217 = vadd.f32 %v213, %v216
    %s218 = sld [smem:[#allocation6 + $0x4]]
    %v219 = vstv %s218
    %v220 = vadd.f32 %v217, %v219
    %v221 = vmax.f32 %v220, 0.0
    %s222 = sld [smem:[#allocation8 + $0x200]]
    %v223 = vstv %s222
    %v224 = vmul.f32 %v221, %v223
    %v225 = vadd.f32 %v194, %v224
    %s226 = sld [smem:[#allocation8 + $0x201]]
    %v227 = vstv %s226
    %v228 = vmul.f32 %v221, %v227
    %v229 = vadd.f32 %v198, %v228
    %s230 = sld [smem:[#allocation8 + $0x202]]
    %v231 = vstv %s230
    %v232 = vmul.f32 %v221, %v231
    %v233 = vadd.f32 %v202, %v232
    %s234 = sld [smem:[#allocation8 + $0x203]]
    %v235 = vstv %s234
    %v236 = vmul.f32 %v221, %v235
    %v237 = vadd.f32 %v206, %v236
    %s238 = sld [smem:[#allocation8 + $0x204]]
    %v239 = vstv %s238
    %v240 = vmul.f32 %v221, %v239
    %v241 = vadd.f32 %v210, %v240
    %s242 = sld [smem:[#allocation3 + $0x5]]
    %v243 = vstv %s242
    %v244 = vmul.f32 %v89, %v243
    %s245 = sld [smem:[#allocation3 + $0x85]]
    %v246 = vstv %s245
    %v247 = vmul.f32 %v91, %v246
    %v248 = vadd.f32 %v244, %v247
    %s249 = sld [smem:[#allocation6 + $0x5]]
    %v250 = vstv %s249
    %v251 = vadd.f32 %v248, %v250
    %v252 = vmax.f32 %v251, 0.0
    %s253 = sld [smem:[#allocation8 + $0x280]]
    %v254 = vstv %s253
    %v255 = vmul.f32 %v252, %v254
    %v256 = vadd.f32 %v225, %v255
    %s257 = sld [smem:[#allocation8 + $0x281]]
    %v258 = vstv %s257
    %v259 = vmul.f32 %v252, %v258
    %v260 = vadd.f32 %v229, %v259
    %s261 = sld [smem:[#allocation8 + $0x282]]
    %v262 = vstv %s261
    %v263 = vmul.f32 %v252, %v262
    %v264 = vadd.f32 %v233, %v263
    %s265 = sld [smem:[#allocation8 + $0x283]]
    %v266 = vstv %s265
    %v267 = vmul.f32 %v252, %v266
    %v268 = vadd.f32 %v237, %v267
    %s269 = sld [smem:[#allocation8 + $0x284]]
    %v270 = vstv %s269
    %v271 = vmul.f32 %v252, %v270
    %v272 = vadd.f32 %v241, %v271
    %s273 = sld [smem:[#allocation3 + $0x6]]
    %v274 = vstv %s273
    %v275 = vmul.f32 %v89, %v274
    %s276 = sld [smem:[#allocation3 + $0x86]]
    %v277 = vstv %s276
    %v278 = vmul.f32 %v91, %v277
    %v279 = vadd.f32 %v275, %v278
    %s280 = sld [smem:[#allocation6 + $0x6]]
    %v281 = vstv %s280
    %v282 = vadd.f32 %v279, %v281
    %v283 = vmax.f32 %v282, 0.0
    %s284 = sld [smem:[#allocation8 + $0x300]]
    %v285 = vstv %s284
    %v286 = vmul.f32 %v283, %v285
    %v287 = vadd.f32 %v256, %v286
    %s288 = sld [smem:[#allocation8 + $0x301]]
    %v289 = vstv %s288
    %v290 = vmul.f32 %v283, %v289
    %v291 = vadd.f32 %v260, %v290
    %s292 = sld [smem:[#allocation8 + $0x302]]
    %v293 = vstv %s292
    %v294 = vmul.f32 %v283, %v293
    %v295 = vadd.f32 %v264, %v294
    %s296 = sld [smem:[#allocation8 + $0x303]]
    %v297 = vstv %s296
    %v298 = vmul.f32 %v283, %v297
    %v299 = vadd.f32 %v268, %v298
    %s300 = sld [smem:[#allocation8 + $0x304]]
    %v301 = vstv %s300
    %v302 = vmul.f32 %v283, %v301
    %v303 = vadd.f32 %v272, %v302
    %s304 = sld [smem:[#allocation3 + $0x7]]
    %v305 = vstv %s304
    %v306 = vmul.f32 %v89, %v305
    %s307 = sld [smem:[#allocation3 + $0x87]]
    %v308 = vstv %s307
    %v309 = vmul.f32 %v91, %v308
    %v310 = vadd.f32 %v306, %v309
    %s311 = sld [smem:[#allocation6 + $0x7]]
    %v312 = vstv %s311
    %v313 = vadd.f32 %v310, %v312
    %v314 = vmax.f32 %v313, 0.0
    %s315 = sld [smem:[#allocation8 + $0x380]]
    %v316 = vstv %s315
    %v317 = vmul.f32 %v314, %v316
    %v318 = vadd.f32 %v287, %v317
    %s319 = sld [smem:[#allocation8 + $0x381]]
    %v320 = vstv %s319
    %v321 = vmul.f32 %v314, %v320
    %v322 = vadd.f32 %v291, %v321
    %s323 = sld [smem:[#allocation8 + $0x382]]
    %v324 = vstv %s323
    %v325 = vmul.f32 %v314, %v324
    %v326 = vadd.f32 %v295, %v325
    %s327 = sld [smem:[#allocation8 + $0x383]]
    %v328 = vstv %s327
    %v329 = vmul.f32 %v314, %v328
    %v330 = vadd.f32 %v299, %v329
    %s331 = sld [smem:[#allocation8 + $0x384]]
    %v332 = vstv %s331
    %v333 = vmul.f32 %v314, %v332
    %v334 = vadd.f32 %v303, %v333
    %s335 = sld [smem:[#allocation3 + $0x8]]
    %v336 = vstv %s335
    %v337 = vmul.f32 %v89, %v336
    %s338 = sld [smem:[#allocation3 + $0x88]]
    %v339 = vstv %s338
    %v340 = vmul.f32 %v91, %v339
    %v341 = vadd.f32 %v337, %v340
    %s342 = sld [smem:[#allocation6 + $0x8]]
    %v343 = vstv %s342
    %v344 = vadd.f32 %v341, %v343
    %v345 = vmax.f32 %v344, 0.0
    %s346 = sld [smem:[#allocation8 + $0x400]]
    %v347 = vstv %s346
    %v348 = vmul.f32 %v345, %v347
    %v349 = vadd.f32 %v318, %v348
    %s350 = sld [smem:[#allocation8 + $0x401]]
    %v351 = vstv %s350
    %v352 = vmul.f32 %v345, %v351
    %v353 = vadd.f32 %v322, %v352
    %s354 = sld [smem:[#allocation8 + $0x402]]
    %v355 = vstv %s354
    %v356 = vmul.f32 %v345, %v355
    %v357 = vadd.f32 %v326, %v356
    %s358 = sld [smem:[#allocation8 + $0x403]]
    %v359 = vstv %s358
    %v360 = vmul.f32 %v345, %v359
    %v361 = vadd.f32 %v330, %v360
    %s362 = sld [smem:[#allocation8 + $0x404]]
    %v363 = vstv %s362
    %v364 = vmul.f32 %v345, %v363
    %v365 = vadd.f32 %v334, %v364
    %s366 = sld [smem:[#allocation3 + $0x9]]
    %v367 = vstv %s366
    %v368 = vmul.f32 %v89, %v367
    %s369 = sld [smem:[#allocation3 + $0x89]]
    %v370 = vstv %s369
    %v371 = vmul.f32 %v91, %v370
    %v372 = vadd.f32 %v368, %v371
    %s373 = sld [smem:[#allocation6 + $0x9]]
    %v374 = vstv %s373
    %v375 = vadd.f32 %v372, %v374
    %v376 = vmax.f32 %v375, 0.0
    %s377 = sld [smem:[#allocation8 + $0x480]]
    %v378 = vstv %s377
    %v379 = vmul.f32 %v376, %v378
    %v380 = vadd.f32 %v349, %v379
    %s381 = sld [smem:[#allocation8 + $0x481]]
    %v382 = vstv %s381
    %v383 = vmul.f32 %v376, %v382
    %v384 = vadd.f32 %v353, %v383
    %s385 = sld [smem:[#allocation8 + $0x482]]
    %v386 = vstv %s385
    %v387 = vmul.f32 %v376, %v386
    %v388 = vadd.f32 %v357, %v387
    %s389 = sld [smem:[#allocation8 + $0x483]]
    %v390 = vstv %s389
    %v391 = vmul.f32 %v376, %v390
    %v392 = vadd.f32 %v361, %v391
    %s393 = sld [smem:[#allocation8 + $0x484]]
    %v394 = vstv %s393
    %v395 = vmul.f32 %v376, %v394
    %v396 = vadd.f32 %v365, %v395
    %s397 = sld [smem:[#allocation9]]
    %v398 = vstv %s397
    %v399 = vadd.f32 %v380, %v398
    %v400 = vmax.f32 %v399, 0.0
    %s401 = sld [smem:[#allocation11]]
    %v402 = vstv %s401
    %v403 = vmul.f32 %v400, %v402
    %s404 = sld [smem:[#allocation9 + $0x1]]
    %v405 = vstv %s404
    %v406 = vadd.f32 %v384, %v405
    %v407 = vmax.f32 %v406, 0.0
    %s408 = sld [smem:[#allocation11 + $0x80]]
    %v409 = vstv %s408
    %v410 = vmul.f32 %v407, %v409
    %v411 = vadd.f32 %v403, %v410
    %s412 = sld [smem:[#allocation9 + $0x2]]
    %v413 = vstv %s412
    %v414 = vadd.f32 %v388, %v413
    %v415 = vmax.f32 %v414, 0.0
    %s416 = sld [smem:[#allocation11 + $0x100]]
    %v417 = vstv %s416
    %v418 = vmul.f32 %v415, %v417
    %v419 = vadd.f32 %v411, %v418
    %s420 = sld [smem:[#allocation9 + $0x3]]
    %v421 = vstv %s420
    %v422 = vadd.f32 %v392, %v421
    %v423 = vmax.f32 %v422, 0.0
    %s424 = sld [smem:[#allocation11 + $0x180]]
    %v425 = vstv %s424
    %v426 = vmul.f32 %v423, %v425
    %v427 = vadd.f32 %v419, %v426
    %s428 = sld [smem:[#allocation9 + $0x4]]
    %v429 = vstv %s428
    %v430 = vadd.f32 %v396, %v429
    %v431 = vmax.f32 %v430, 0.0
    %s432 = sld [smem:[#allocation11 + $0x200]]
    %v433 = vstv %s432
    %v434 = vmul.f32 %v431, %v433
    %v435 = vadd.f32 %v427, %v434
    %s436 = sld [smem:[#allocation2]]
    %v437 = vstv %s436
    %v438 = vadd.f32 %v435, %v437
    %439 = vst [vmem:[#allocation12] sm:$0xff] %v438
    // Predicated region
    $region50: #{tpu_custom_call.1} parent=1 // pred_check
      _
    $region51: #{tpu_custom_call.1} parent=1 // pred_check_branch
      %441 = sbr.rel (0) target = $region53
    $region52: #{tpu_custom_call.1} parent=1 // pred_region
      %s443 = ssub.s32 128, 128
      %444 = vsyncadd [#allocation4], %s443
      %s446 = sshll.u32 [#allocation12], 4
      %s447 = int_to_ptr.vmem [resolvable:$true] %s446
      %449 = dma.vmem_to_hbm [thread:$0]  %s447, 128, %s7, [#allocation4]
    $region53: #{tpu_custom_call.1} parent=1 // pred_fallthru
      _
    // Predicated region
    $region54: #{tpu_custom_call.1} parent=1 // pred_check
      _
    $region55: #{tpu_custom_call.1} parent=1 // pred_check_branch
      %451 = sbr.rel (0) target = $region57
    $region56: #{tpu_custom_call.1} parent=1 // pred_region
      %452 = dma.done [#allocation4], 128
    $region57: #{tpu_custom_call.1} parent=1 // pred_fallthru
      _
    %453 = vsyncpa [#allocation4], 1
    %454 = vsyncpa [#allocation5], 1
    %455 = vsyncpa [#allocation7], 1
    %456 = vsyncpa [#allocation10], 1

</llo_original>
